<compile_context>
chip_gen: v5e
topology: v5e:2x2
jax: 0.10.0
libtpu: 0.0.40
codegen_flags: <defaults>
</compile_context>

<pallas_src>
import math
import functools

import jax
import jax.numpy as jnp
from jax.experimental import pallas as pl
from jax.experimental.pallas import tpu as pltpu

_LANE = 128
_SUBLANE = 8
_ROW_QUANTUM = 16          # block-row granularity (safe for f32 and bf16)
_MAX_BLOCK_ROWS = 2048     # 2048 * 128 * 4B = 1 MiB per f32 input block
_NSPLIT = 2                # leading "parallel" axis (v7x megacore split)


def _round_up(x, m):
    return (x + m - 1) // m * m


def _l1_log_kernel(fake_ref, real_ref, out_ref, *, spc, block_rows, rows):
    c = pl.program_id(0)
    j = pl.program_id(1)
    i = c * spc + j                      # logical (unclamped) block index

    @pl.when(j == 0)
    def _():
        out_ref[...] = jnp.zeros_like(out_ref)

    f = fake_ref[...].astype(jnp.float32)
    r = real_ref[...].astype(jnp.float32)
    # One EUP log (plus a cheap divide) instead of two logs:
    #   |log(real) - log(fake)| == |log(real / fake)|
    diff = jnp.abs(jnp.log(r / f))

    first_row = i * block_rows

    def _accumulate(d):
        out_ref[...] += jnp.sum(d.reshape(-1, _SUBLANE, _LANE), axis=0)[None]

    @pl.when(first_row + block_rows <= rows)
    def _():                             # fully in-bounds block (hot path, no mask)
        _accumulate(diff)

    @pl.when(first_row + block_rows > rows)
    def _():                             # ragged tail / overhanging (clamped) block
        row_ids = first_row + jax.lax.broadcasted_iota(jnp.int32, diff.shape, 0)
        _accumulate(jnp.where(row_ids < rows, diff, 0.0))


def l1_log_loss(fake, real):
    """mean(|log(real) - log(fake)|), matching L1_log.forward for equal shapes."""
    if fake.shape != real.shape:
        # TODO(synk): bilinear upsample path (F.upsample) not implemented in-kernel.
        raise NotImplementedError("fake/real shape mismatch not supported")

    n = int(math.prod(fake.shape))
    rows = pl.cdiv(n, _LANE)

    # Blocking: rows split over a (NSPLIT parallel) x (spc arbitrary) grid.
    spc = max(1, pl.cdiv(rows, _NSPLIT * _MAX_BLOCK_ROWS))
    block_rows = _round_up(pl.cdiv(rows, _NSPLIT * spc), _ROW_QUANTUM)
    if block_rows > rows:                # tiny input: one full-extent block
        rows = _round_up(rows, _SUBLANE)
        block_rows = rows
        spc = 1
    nb_real = pl.cdiv(rows, block_rows)  # number of real (in-bounds) blocks
    n_pad = rows * _LANE

    def _prep(x):
        x = x.reshape(-1)                # free reshape; keep native dtype
        if n_pad > n:
            # rare path (n % 128 != 0 or tiny input): pad tail with 1.0 so
            # log(real_pad / fake_pad) == 0 contributes nothing.
            x = jnp.concatenate([x, jnp.ones((n_pad - n,), x.dtype)])
        return x.reshape(rows, _LANE)

    fake2d = _prep(fake)
    real2d = _prep(real)

    def in_idx(c, j):
        # Clamp overhanging logical block indices so the DMA stays in bounds;
        # the kernel's mask zeroes their contribution.
        return (jnp.minimum(c * spc + j, nb_real - 1), 0)

    kernel = functools.partial(
        _l1_log_kernel, spc=spc, block_rows=block_rows, rows=rows)

    partial_sums = pl.pallas_call(
        kernel,
        out_shape=jax.ShapeDtypeStruct((_NSPLIT, _SUBLANE, _LANE), jnp.float32),
        grid_spec=pltpu.PrefetchScalarGridSpec(
            num_scalar_prefetch=0,
            grid=(_NSPLIT, spc),
            in_specs=[
                pl.BlockSpec((block_rows, _LANE), in_idx),
                pl.BlockSpec((block_rows, _LANE), in_idx),
            ],
            out_specs=pl.BlockSpec((1, _SUBLANE, _LANE), lambda c, j: (c, 0, 0)),
        ),
        compiler_params=pltpu.CompilerParams(
            dimension_semantics=("parallel", "arbitrary"),
        ),
    )(fake2d, real2d)

    # Single tiny reduction + mean normalization outside the hot loop.
    return jnp.sum(partial_sums) / jnp.float32(n)


if __name__ == "__main__":
    key = jax.random.PRNGKey(0)
    k1, k2 = jax.random.split(key)

    # NCHW, small shapes; values kept strictly positive (log input).
    shape = (2, 4, 16, 16)
    fake = jax.random.uniform(k1, shape, jnp.float32, minval=0.1, maxval=2.0)
    real = jax.random.uniform(k2, shape, jnp.float32, minval=0.1, maxval=2.0)

    loss = l1_log_loss(fake, real)
    jax.block_until_ready(loss)

    # correctness check against plain-JAX reference
    ref = jnp.mean(jnp.abs(jnp.log(real) - jnp.log(fake)))
    assert jnp.allclose(loss, ref, rtol=1e-5, atol=1e-6), (loss, ref)

    print("KERNEL_OK")
</pallas_src>

<mosaic_0001>
module attributes {stable_mosaic.version = 11 : i64} {
  func.func @_l1_log_kernel(%arg0: i32, %arg1: i32, %arg2: memref<16x128xf32, #tpu.memory_space<vmem>>, %arg3: memref<16x128xf32, #tpu.memory_space<vmem>>, %arg4: memref<1x8x128xf32, #tpu.memory_space<vmem>>) attributes {dimension_semantics = [#tpu.dimension_semantics<parallel>, #tpu.dimension_semantics<arbitrary>], iteration_bounds = array<i64: 2, 1>, scalar_prefetch = 0 : i64, scratch_operands = 0 : i64, tpu.core_type = #tpu.core_type<tc>, window_params = [{transform_indices = @transform_0, window_bounds = array<i64: 16, 128>}, {transform_indices = @transform_1, window_bounds = array<i64: 16, 128>}, {transform_indices = @transform_2, window_bounds = array<i64: 1, 8, 128>}]} {
    %c1_i32 = arith.constant 1 : i32
    %0 = arith.muli %arg0, %c1_i32 : i32
    %1 = arith.addi %0, %arg1 : i32
    %c0_i32 = arith.constant 0 : i32
    %2 = arith.cmpi eq, %arg1, %c0_i32 : i32
    %3 = arith.extui %2 : i1 to i32
    %c0_i32_0 = arith.constant 0 : i32
    %4 = arith.cmpi ne, %3, %c0_i32_0 : i32
    scf.if %4 {
      %cst = arith.constant 0.000000e+00 : f32
      %19 = vector.broadcast %cst : f32 to vector<1x8x128xf32>
      %c0_10 = arith.constant 0 : index
      %c0_11 = arith.constant 0 : index
      %c0_12 = arith.constant 0 : index
      %20 = vector.load %arg4[%c0_10, %c0_11, %c0_12] : memref<1x8x128xf32, #tpu.memory_space<vmem>>, vector<1x8x128xf32>
      tpu.vector_store %arg4[%c0_10, %c0_11, %c0_12], %19 {strides = array<i32>} : memref<1x8x128xf32, #tpu.memory_space<vmem>>, vector<1x8x128xf32>,
    } else {
    }
    %c0 = arith.constant 0 : index
    %c0_1 = arith.constant 0 : index
    %5 = vector.load %arg2[%c0, %c0_1] : memref<16x128xf32, #tpu.memory_space<vmem>>, vector<16x128xf32>
    %c0_2 = arith.constant 0 : index
    %c0_3 = arith.constant 0 : index
    %6 = vector.load %arg3[%c0_2, %c0_3] : memref<16x128xf32, #tpu.memory_space<vmem>>, vector<16x128xf32>
    %7 = arith.divf %6, %5 : vector<16x128xf32>
    %8 = math.log %7 : vector<16x128xf32>
    %9 = math.absf %8 : vector<16x128xf32>
    %c16_i32 = arith.constant 16 : i32
    %10 = arith.muli %1, %c16_i32 : i32
    %c16_i32_4 = arith.constant 16 : i32
    %11 = arith.addi %10, %c16_i32_4 : i32
    %c16_i32_5 = arith.constant 16 : i32
    %12 = arith.cmpi sle, %11, %c16_i32_5 : i32
    %13 = arith.extui %12 : i1 to i32
    %c0_i32_6 = arith.constant 0 : i32
    %14 = arith.cmpi ne, %13, %c0_i32_6 : i32
    scf.if %14 {
      %c0_10 = arith.constant 0 : index
      %c0_11 = arith.constant 0 : index
      %c0_12 = arith.constant 0 : index
      %19 = vector.load %arg4[%c0_10, %c0_11, %c0_12] : memref<1x8x128xf32, #tpu.memory_space<vmem>>, vector<1x8x128xf32>
      %20 = vector.shape_cast %9 : vector<16x128xf32> to vector<2x8x128xf32>
      %cst = arith.constant dense<0.000000e+00> : vector<8x128xf32>
      %21 = vector.multi_reduction <add>, %20, %cst [0] : vector<2x8x128xf32> to vector<8x128xf32>
      %22 = vector.shape_cast %21 : vector<8x128xf32> to vector<1x8x128xf32>
      %23 = arith.addf %19, %22 : vector<1x8x128xf32>
      %c0_13 = arith.constant 0 : index
      %c0_14 = arith.constant 0 : index
      %c0_15 = arith.constant 0 : index
      %24 = vector.load %arg4[%c0_13, %c0_14, %c0_15] : memref<1x8x128xf32, #tpu.memory_space<vmem>>, vector<1x8x128xf32>
      tpu.vector_store %arg4[%c0_13, %c0_14, %c0_15], %23 {strides = array<i32>} : memref<1x8x128xf32, #tpu.memory_space<vmem>>, vector<1x8x128xf32>,
    } else {
    }
    %c16_i32_7 = arith.constant 16 : i32
    %15 = arith.addi %10, %c16_i32_7 : i32
    %c16_i32_8 = arith.constant 16 : i32
    %16 = arith.cmpi sgt, %15, %c16_i32_8 : i32
    %17 = arith.extui %16 : i1 to i32
    %c0_i32_9 = arith.constant 0 : i32
    %18 = arith.cmpi ne, %17, %c0_i32_9 : i32
    scf.if %18 {
      %19 = tpu.iota {dimensions = array<i32: 0>} : vector<16x128xi32>
      %20 = vector.broadcast %10 : i32 to vector<16x128xi32>
      %21 = arith.addi %20, %19 : vector<16x128xi32>
      %c16_i32_10 = arith.constant 16 : i32
      %22 = vector.broadcast %c16_i32_10 : i32 to vector<16x128xi32>
      %23 = arith.cmpi slt, %21, %22 : vector<16x128xi32>
      %cst = arith.constant 0.000000e+00 : f32
      %24 = vector.broadcast %cst : f32 to vector<16x128xf32>
      %25 = arith.select %23, %9, %24 : vector<16x128xi1>, vector<16x128xf32>
      %c0_11 = arith.constant 0 : index
      %c0_12 = arith.constant 0 : index
      %c0_13 = arith.constant 0 : index
      %26 = vector.load %arg4[%c0_11, %c0_12, %c0_13] : memref<1x8x128xf32, #tpu.memory_space<vmem>>, vector<1x8x128xf32>
      %27 = vector.shape_cast %25 : vector<16x128xf32> to vector<2x8x128xf32>
      %cst_14 = arith.constant dense<0.000000e+00> : vector<8x128xf32>
      %28 = vector.multi_reduction <add>, %27, %cst_14 [0] : vector<2x8x128xf32> to vector<8x128xf32>
      %29 = vector.shape_cast %28 : vector<8x128xf32> to vector<1x8x128xf32>
      %30 = arith.addf %26, %29 : vector<1x8x128xf32>
      %c0_15 = arith.constant 0 : index
      %c0_16 = arith.constant 0 : index
      %c0_17 = arith.constant 0 : index
      %31 = vector.load %arg4[%c0_15, %c0_16, %c0_17] : memref<1x8x128xf32, #tpu.memory_space<vmem>>, vector<1x8x128xf32>
      tpu.vector_store %arg4[%c0_15, %c0_16, %c0_17], %30 {strides = array<i32>} : memref<1x8x128xf32, #tpu.memory_space<vmem>>, vector<1x8x128xf32>,
    } else {
    }
    return
  }
  func.func @transform_0(%arg0: i32, %arg1: i32) -> (i32, i32) {
    %c1_i32 = arith.constant 1 : i32
    %0 = arith.muli %arg0, %c1_i32 : i32
    %1 = arith.addi %0, %arg1 : i32
    %c0_i32 = arith.constant 0 : i32
    %2 = arith.minsi %1, %c0_i32 : i32
    %c0_i32_0 = arith.constant 0 : i32
    %c0_i32_1 = arith.constant 0 : i32
    return %2, %c0_i32_0 : i32, i32
  }
  func.func @transform_1(%arg0: i32, %arg1: i32) -> (i32, i32) {
    %c1_i32 = arith.constant 1 : i32
    %0 = arith.muli %arg0, %c1_i32 : i32
    %1 = arith.addi %0, %arg1 : i32
    %c0_i32 = arith.constant 0 : i32
    %2 = arith.minsi %1, %c0_i32 : i32
    %c0_i32_0 = arith.constant 0 : i32
    %c0_i32_1 = arith.constant 0 : i32
    return %2, %c0_i32_0 : i32, i32
  }
  func.func @transform_2(%arg0: i32, %arg1: i32) -> (i32, i32, i32) {
    %c0_i32 = arith.constant 0 : i32
    %c0_i32_0 = arith.constant 0 : i32
    %c0_i32_1 = arith.constant 0 : i32
    return %arg0, %c0_i32, %c0_i32_0 : i32, i32, i32
  }
}

</mosaic_0001>

<llo_original>
// kernel: tpu_custom_call.1
$region0: #{tpu_custom_call.1}
  #allocation0 [shape = 'u32[]', space=smem, size = 0x4, offset = 0x4, fixed_abs, tag = 'smem constant byte address 0x4 - core index']
  #allocation1 [shape = 'u32[72,128]{1,0:T(1,128)}', space=vmem, size = 0x9000, scoped, tag = 'internal scratch']
  %s0 = inlined_call_operand.hbm [shape: f32[16,128], index: 0, kind: input, shape index: {}]
  %s1 = inlined_call_operand.hbm [shape: f32[16,128], index: 1, kind: input, shape index: {}]
  %s2 = inlined_call_operand.hbm [shape: f32[2,8,128], index: 2, kind: output, shape index: {}]
  %s3 = sld [smem:[#allocation0]]
  $region61: #{tpu_custom_call.1} parent=0
    _
  %s5 = ssub.s32 1, %s3
  %s6 = scalar_select 0, %s5, %s3
  $region1: #{tpu_custom_call.1} parent=0
    #allocation2 [shape = 'u8[16384]{0}', space=vmem, size = 0x4000, scoped, tag = 'input window, operand 0']
    #allocation3 [shape = 's32[2]{0}', space=sflag, size = 0x8, scoped, tag = 'scoped memory for tpu_custom_call.1']
    #allocation4 [shape = 's32[2]{0}', space=sflag, size = 0x8, scoped, tag = 'scoped memory for tpu_custom_call.1']
    #allocation5 [shape = 'u8[16384]{0}', space=vmem, size = 0x4000, scoped, tag = 'input window, operand 1']
    #allocation6 [shape = 's32[2]{0}', space=sflag, size = 0x8, scoped, tag = 'scoped memory for tpu_custom_call.1']
    #allocation7 [shape = 'u8[8192]{0}', space=vmem, size = 0x2000, scoped, tag = 'output window, operand 0']
    %7 = vsyncpa [#allocation3], 0
    %s8 = scalar_lea.sflag [#allocation3], 1
    %9 = vsyncpa %s8, 0
    %10 = vsyncpa [#allocation6], 0
    %s11 = scalar_lea.sflag [#allocation6], 1
    %12 = vsyncpa %s11, 0
    %13 = vsyncpa [#allocation4], 0
    %s14 = scalar_lea.sflag [#allocation4], 1
    %15 = vsyncpa %s14, 0
    loop: start=0, step=1, limit=4
    $region2: #{tpu_custom_call.1} parent=1 // loop_pre_header
      _
    $region3: #{tpu_custom_call.1} parent=1 // loop_header
      %s17 = sphi 0, %s21
      %p18 = scmp.ge.s32.totalorder %s17, 4
      %s24 = sphi 0, %s36
      %s25 = sphi 0, %s32
      %s26 = sphi 0, %s24
      %s27 = sphi 0, %s25
      %s28 = sphi 0, %s26
      %s29 = sphi 0, %s27
      %s45 = sphi 0, %s47
      %s48 = sphi 0, %s45
      %s49 = sphi 0, %s48
      %s65 = sphi 0, %s49
      %s77 = sphi 0, %s79
      %s80 = sphi 0, %s77
      %s81 = sphi 0, %s80
      %s97 = sphi 0, %s81
      %s103 = sphi 0, %s105
      %s106 = sphi 0, %s103
      %s107 = sphi 0, %s106
      %s123 = sphi 0, %s107
    $region4: #{tpu_custom_call.1} parent=1 // loop_header_branch
      %20 = sbr.rel (%p18) target = $region8
    $region5: #{tpu_custom_call.1} parent=1 // loop_body
      %s22 = ssub.s32 %s17, 1
      %s23 = ssub.s32 %s17, 2
      %s30 = sadd.s32 1, %s25
      %p31 = scmp.ge.s32.totalorder %s30, 1
      %s32 = scalar_select %p31, 0, %s30
      %s33 = sadd.s32 1, %s24
      %s34 = scalar_select %p31, %s33, %s24
      %p35 = scmp.ge.s32.totalorder %s34, 2
      %s36 = scalar_select %p35, 0, %s34
      %s37 = sadd.s32 %s24, %s25
      %p38 = scmp.lt.s32.totalorder %s37, 0
      %s39 = scalar_select %p38, %s37, 0
      %s40 = sadd.s32 %s36, %s32
      %p41 = scmp.lt.s32.totalorder %s40, 0
      %s42 = scalar_select %p41, %s40, 0
      %s43 = ssub.s32 %s39, %s42
      %p44 = scmp.eq.s32.totalorder %s43, 0
      %s46 = sadd.s32 %s45, 1
      %s47 = scalar_select %p44, %s45, %s46
      %p50 = pneg %p44
      %p51 = scmp.eq.s32.totalorder %s17, 1
      %p52 = por %p50, %p51
      %p53 = scmp.ne.s32.totalorder %s45, %s48
      %p54 = scmp.eq.s32.totalorder %s17, 0
      %p55 = por %p53, %p54
      %p56 = scmp.ne.s32.totalorder %s45, %s48
      %p57 = scmp.eq.s32.totalorder %s22, 1
      %p58 = por %p56, %p57
      %p59 = scmp.ne.s32.totalorder %s48, %s49
      %p60 = scmp.eq.s32.totalorder %s22, 0
      %p61 = por %p59, %p60
      %p62 = scmp.ne.s32.totalorder %s48, %s49
      %p63 = scmp.eq.s32.totalorder %s23, 1
      %p64 = por %p62, %p63
      %p66 = scmp.ne.s32.totalorder %s49, %s65
      %p67 = scmp.eq.s32.totalorder %s23, 0
      %p68 = por %p66, %p67
      %s69 = sadd.s32 %s24, %s25
      %p70 = scmp.lt.s32.totalorder %s69, 0
      %s71 = scalar_select %p70, %s69, 0
      %s72 = sadd.s32 %s36, %s32
      %p73 = scmp.lt.s32.totalorder %s72, 0
      %s74 = scalar_select %p73, %s72, 0
      %s75 = ssub.s32 %s71, %s74
      %p76 = scmp.eq.s32.totalorder %s75, 0
      %s78 = sadd.s32 %s77, 1
      %s79 = scalar_select %p76, %s77, %s78
      %p82 = pneg %p76
      %p83 = scmp.eq.s32.totalorder %s17, 1
      %p84 = por %p82, %p83
      %p85 = scmp.ne.s32.totalorder %s77, %s80
      %p86 = scmp.eq.s32.totalorder %s17, 0
      %p87 = por %p85, %p86
      %p88 = scmp.ne.s32.totalorder %s77, %s80
      %p89 = scmp.eq.s32.totalorder %s22, 1
      %p90 = por %p88, %p89
      %p91 = scmp.ne.s32.totalorder %s80, %s81
      %p92 = scmp.eq.s32.totalorder %s22, 0
      %p93 = por %p91, %p92
      %p94 = scmp.ne.s32.totalorder %s80, %s81
      %p95 = scmp.eq.s32.totalorder %s23, 1
      %p96 = por %p94, %p95
      %p98 = scmp.ne.s32.totalorder %s81, %s97
      %p99 = scmp.eq.s32.totalorder %s23, 0
      %p100 = por %p98, %p99
      %s101 = ssub.s32 %s24, %s36
      %p102 = scmp.eq.s32.totalorder %s101, 0
      %s104 = sadd.s32 %s103, 1
      %s105 = scalar_select %p102, %s103, %s104
      %p108 = pneg %p102
      %p109 = scmp.eq.s32.totalorder %s17, 1
      %p110 = por %p108, %p109
      %p111 = scmp.ne.s32.totalorder %s103, %s106
      %p112 = scmp.eq.s32.totalorder %s17, 0
      %p113 = por %p111, %p112
      %p114 = scmp.ne.s32.totalorder %s103, %s106
      %p115 = scmp.eq.s32.totalorder %s22, 1
      %p116 = por %p114, %p115
      %p117 = scmp.ne.s32.totalorder %s106, %s107
      %p118 = scmp.eq.s32.totalorder %s22, 0
      %p119 = por %p117, %p118
      %p120 = scmp.ne.s32.totalorder %s106, %s107
      %p121 = scmp.eq.s32.totalorder %s23, 1
      %p122 = por %p120, %p121
      %p124 = scmp.ne.s32.totalorder %s107, %s123
      %p125 = scmp.eq.s32.totalorder %s23, 0
      %p126 = por %p124, %p125
      %p127 = scmp.le.s32.totalorder 1, %s17
      %p128 = scmp.lt.s32.totalorder %s17, 3
      %p129 = pnand %p127, %p128
      %p130 = pneg %p129
      // Predicated region
      $region9: #{tpu_custom_call.1} parent=5 // pred_check
        _
      $region10: #{tpu_custom_call.1} parent=5 // pred_check_branch
        %132 = sbr.rel (%p129) target = $region12
      $region11: #{tpu_custom_call.1} parent=5 // pred_region
        %s133 = ssub.s32 %s17, 1
      $region12: #{tpu_custom_call.1} parent=5 // pred_fallthru
        _
      %p134 = scmp.lt.s32.totalorder %s17, 2
      // Predicated region
      $region13: #{tpu_custom_call.1} parent=5 // pred_check
        %p135 = pneg %p134
      $region14: #{tpu_custom_call.1} parent=5 // pred_check_branch
        %137 = sbr.rel (%p135) target = $region16
      $region15: #{tpu_custom_call.1} parent=5 // pred_region
        // Predicated region
        $region17: #{tpu_custom_call.1} parent=15 // pred_check
          %p138 = pneg %p55
        $region18: #{tpu_custom_call.1} parent=15 // pred_check_branch
          %140 = sbr.rel (%p138) target = $region20
        $region19: #{tpu_custom_call.1} parent=15 // pred_region
          %s141 = sand.u32 %s45, 1
          %s142 = scalar_lea.sflag [#allocation3], %s141
          %s143 = sand.u32 %s45, 1
          %s144 = smul.addr %s143, 16
          %s145 = scalar_lea.vmem [#allocation2], %s144
          %s146 = sadd.s32 %s24, %s25
          %p147 = scmp.lt.s32.totalorder %s146, 0
          %s148 = scalar_select %p147, %s146, 0
          %s149 = smul.u32 2, %s148
          %151 = vsyncadd %s142, 0
          %s152 = smul.addr %s149, 8
          %s153 = scalar_lea.hbm %s0, %s152
          %s154 = sshll.u32 %s153, 4
          %s155 = int_to_ptr.hbm [resolvable:$true] %s154
          %s156 = sshll.u32 %s145, 4
          %s157 = int_to_ptr.vmem [resolvable:$true] %s156
          %162 = dma.hbm_to_vmem [thread:$0]  %s155, 256, %s157, %s142, 128, 128, 8
        $region20: #{tpu_custom_call.1} parent=15 // pred_fallthru
          _
        // Predicated region
        $region21: #{tpu_custom_call.1} parent=15 // pred_check
          %p163 = pneg %p87
        $region22: #{tpu_custom_call.1} parent=15 // pred_check_branch
          %165 = sbr.rel (%p163) target = $region24
        $region23: #{tpu_custom_call.1} parent=15 // pred_region
          %s166 = sand.u32 %s77, 1
          %s167 = scalar_lea.sflag [#allocation6], %s166
          %s168 = sand.u32 %s77, 1
          %s169 = smul.addr %s168, 16
          %s170 = scalar_lea.vmem [#allocation5], %s169
          %s171 = sadd.s32 %s24, %s25
          %p172 = scmp.lt.s32.totalorder %s171, 0
          %s173 = scalar_select %p172, %s171, 0
          %s174 = smul.u32 2, %s173
          %176 = vsyncadd %s167, 0
          %s177 = smul.addr %s174, 8
          %s178 = scalar_lea.hbm %s1, %s177
          %s179 = sshll.u32 %s178, 4
          %s180 = int_to_ptr.hbm [resolvable:$true] %s179
          %s181 = sshll.u32 %s170, 4
          %s182 = int_to_ptr.vmem [resolvable:$true] %s181
          %187 = dma.hbm_to_vmem [thread:$0]  %s180, 256, %s182, %s167, 128, 128, 8
        $region24: #{tpu_custom_call.1} parent=15 // pred_fallthru
          _
      $region16: #{tpu_custom_call.1} parent=5 // pred_fallthru
        _
      %p188 = scmp.le.s32.totalorder 1, %s17
      %p189 = scmp.lt.s32.totalorder %s17, 3
      %p190 = pnand %p188, %p189
      %p191 = pneg %p190
      // Predicated region
      $region25: #{tpu_custom_call.1} parent=5 // pred_check
        _
      $region26: #{tpu_custom_call.1} parent=5 // pred_check_branch
        %193 = sbr.rel (%p190) target = $region28
      $region27: #{tpu_custom_call.1} parent=5 // pred_region
        %s194 = ssub.s32 %s17, 1
        %s195 = sand.u32 %s48, 1
        %s196 = scalar_lea.sflag [#allocation3], %s195
        %s197 = sand.u32 %s48, 1
        %s198 = smul.addr %s197, 16
        %s199 = scalar_lea.vmem [#allocation2], %s198
        // Predicated region
        $region29: #{tpu_custom_call.1} parent=27 // pred_check
          %p200 = pneg %p61
        $region30: #{tpu_custom_call.1} parent=27 // pred_check_branch
          %202 = sbr.rel (%p200) target = $region32
        $region31: #{tpu_custom_call.1} parent=27 // pred_region
          %204 = dma.done %s196, 256
        $region32: #{tpu_custom_call.1} parent=27 // pred_fallthru
          _
        %s205 = sand.u32 %s80, 1
        %s206 = scalar_lea.sflag [#allocation6], %s205
        %s207 = sand.u32 %s80, 1
        %s208 = smul.addr %s207, 16
        %s209 = scalar_lea.vmem [#allocation5], %s208
        // Predicated region
        $region33: #{tpu_custom_call.1} parent=27 // pred_check
          %p210 = pneg %p93
        $region34: #{tpu_custom_call.1} parent=27 // pred_check_branch
          %212 = sbr.rel (%p210) target = $region36
        $region35: #{tpu_custom_call.1} parent=27 // pred_region
          %214 = dma.done %s206, 256
        $region36: #{tpu_custom_call.1} parent=27 // pred_fallthru
          _
        %s215 = sand.u32 %s48, 1
        %s216 = scalar_lea.sflag [#allocation3], %s215
        %s217 = sand.u32 %s48, 1
        %s218 = smul.addr %s217, 16
        %s219 = scalar_lea.vmem [#allocation2], %s218
        %p220 = pneg %p61
        %p221 = pneg %p58
        %s222 = sand.u32 %s80, 1
        %s223 = scalar_lea.sflag [#allocation6], %s222
        %s224 = sand.u32 %s80, 1
        %s225 = smul.addr %s224, 16
        %s226 = scalar_lea.vmem [#allocation5], %s225
        %p227 = pneg %p93
        %p228 = pneg %p90
        %p229 = pneg %p119
        %p230 = pneg %p116
        %s231 = sand.u32 %s106, 1
        %s232 = scalar_lea.sflag [#allocation4], %s231
        %s233 = sand.u32 %s106, 1
        %s234 = smul.addr %s233, 8
        %s235 = scalar_lea.vmem [#allocation7], %s234
        %s236 = sadd.s32 %s26, %s27
        %p237 = scmp.lt.s32.totalorder %s236, 0
        %s238 = scalar_select %p237, %s236, 0
        %s239 = smul.u32 2, %s238
        %s240 = sadd.s32 %s26, %s27
        %p241 = scmp.lt.s32.totalorder %s240, 0
        %s242 = scalar_select %p241, %s240, 0
        %s243 = smul.u32 2, %s242
        %s244 = sadd.s32 %s26, %s27
        %p245 = scmp.eq.s32.totalorder %s27, 0
        // Predicated region
        $region37: #{tpu_custom_call.1} parent=27 // pred_check
          %p246 = pneg %p245
        $region38: #{tpu_custom_call.1} parent=27 // pred_check_branch
          %248 = sbr.rel (%p246) target = $region40
        $region39: #{tpu_custom_call.1} parent=27 // pred_region
          %249 = vst [vmem:[%s235] sm:$0xff] 0.0
        $region40: #{tpu_custom_call.1} parent=27 // pred_fallthru
          _
        %v250 = vld [vmem:[%s199] sm:$0xff]
        %v251 = vld [vmem:[%s199 + $0x8] sm:$0xff]
        %v252 = vld [vmem:[%s209] sm:$0xff]
        %v253 = vld [vmem:[%s209 + $0x8] sm:$0xff]
        %v254 = vrcp.pop %v250
        %v255 = vmul.f32 %v250, %v254
        %v256 = vsub.f32 1.0, %v255
        %v257 = vmul.f32 %v254, %v256
        %v258 = vadd.f32 %v254, %v257
        %vm259 = vweird.f32 %v250
        %vm260 = vweird.f32 %v254
        %vm261 = vmor %vm259, %vm260
        %v262 = vsel %vm261, %v254, %v258
        %v263 = vand.u32 2147483647, %v250
        %vm264 = vcmp.eq.f32.partialorder %v263, 8.507059e+37
        %v265 = vand.u32 %v250, 2147483648
        %v266 = vor.u32 1.1754944e-38, %v265
        %v267 = vsel %vm264, %v266, %v262
        %v268 = vmul.f32 %v252, %v267
        %v269 = vrcp.pop %v251
        %v270 = vmul.f32 %v251, %v269
        %v271 = vsub.f32 1.0, %v270
        %v272 = vmul.f32 %v269, %v271
        %v273 = vadd.f32 %v269, %v272
        %vm274 = vweird.f32 %v251
        %vm275 = vweird.f32 %v269
        %vm276 = vmor %vm274, %vm275
        %v277 = vsel %vm276, %v269, %v273
        %v278 = vand.u32 2147483647, %v251
        %vm279 = vcmp.eq.f32.partialorder %v278, 8.507059e+37
        %v280 = vand.u32 %v251, 2147483648
        %v281 = vor.u32 1.1754944e-38, %v280
        %v282 = vsel %vm279, %v281, %v277
        %v283 = vmul.f32 %v253, %v282
        %v284 = vlog2.pop %v268
        %v285 = vmul.f32 %v284, 0.6931472
        %v286 = vlog2.pop %v283
        %v287 = vmul.f32 %v286, 0.6931472
        %v288 = vand.u32 2147483647, %v285
        %v289 = vand.u32 2147483647, %v287
        %s290 = smul.u32 %s244, 16
        %s291 = sadd.s32 %s290, 16
        %p292 = scmp.le.s32.totalorder %s291, 16
        // Predicated region
        $region41: #{tpu_custom_call.1} parent=27 // pred_check
          %p293 = pneg %p292
        $region42: #{tpu_custom_call.1} parent=27 // pred_check_branch
          %295 = sbr.rel (%p293) target = $region44
        $region43: #{tpu_custom_call.1} parent=27 // pred_region
          %v296 = vld [vmem:[%s235] sm:$0xff]
          %v297 = vadd.f32 %v288, %v289
          %v298 = vadd.f32 %v296, %v297
          %299 = vst [vmem:[%s235] sm:$0xff] %v298
        $region44: #{tpu_custom_call.1} parent=27 // pred_fallthru
          _
        %p300 = scmp.gt.s32.totalorder %s291, 16
        // Predicated region
        $region45: #{tpu_custom_call.1} parent=27 // pred_check
          %p301 = pneg %p300
        $region46: #{tpu_custom_call.1} parent=27 // pred_check_branch
          %303 = sbr.rel (%p301) target = $region48
        $region47: #{tpu_custom_call.1} parent=27 // pred_region
          %v304 = vlaneseq
          %v305 = vshrl.u32 %v304, 7
          %v306 = vadd.s32 %v305, 8
          %v307 = vstv %s290
          %v308 = vadd.s32 %v307, %v305
          %v309 = vadd.s32 %v307, %v306
          %vm310 = vcmp.lt.s32.totalorder %v308, 16
          %vm311 = vcmp.lt.s32.totalorder %v309, 16
          %v312 = vsel %vm310, %v288, 0.0
          %v313 = vsel %vm311, %v289, 0.0
          %v314 = vld [vmem:[%s235] sm:$0xff]
          %v315 = vadd.f32 %v312, %v313
          %v316 = vadd.f32 %v314, %v315
          %317 = vst [vmem:[%s235] sm:$0xff] %v316
        $region48: #{tpu_custom_call.1} parent=27 // pred_fallthru
          _
        %s318 = sand.u32 %s106, 1
        %s319 = scalar_lea.sflag [#allocation4], %s318
        %s320 = sand.u32 %s106, 1
        %s321 = smul.addr %s320, 8
        %s322 = scalar_lea.vmem [#allocation7], %s321
        // Predicated region
        $region49: #{tpu_custom_call.1} parent=27 // pred_check
          %p323 = pneg %p116
        $region50: #{tpu_custom_call.1} parent=27 // pred_check_branch
          %325 = sbr.rel (%p323) target = $region52
        $region51: #{tpu_custom_call.1} parent=27 // pred_region
          %327 = vsyncadd %s319, 0
          %s328 = smul.addr %s26, 8
          %s329 = scalar_lea.hbm %s2, %s328
          %s331 = sshll.u32 %s322, 4
          %s332 = int_to_ptr.vmem [resolvable:$true] %s331
          %s333 = sshll.u32 %s329, 4
          %s334 = int_to_ptr.hbm [resolvable:$true] %s333
          %336 = dma.vmem_to_hbm [thread:$0]  %s332, 128, %s334, %s319
        $region52: #{tpu_custom_call.1} parent=27 // pred_fallthru
          _
      $region28: #{tpu_custom_call.1} parent=5 // pred_fallthru
        _
      %p337 = scmp.le.s32.totalorder 2, %s17
      // Predicated region
      $region53: #{tpu_custom_call.1} parent=5 // pred_check
        %p338 = pneg %p337
      $region54: #{tpu_custom_call.1} parent=5 // pred_check_branch
        %340 = sbr.rel (%p338) target = $region56
      $region55: #{tpu_custom_call.1} parent=5 // pred_region
        %s341 = ssub.s32 %s17, 2
        // Predicated region
        $region57: #{tpu_custom_call.1} parent=55 // pred_check
          %p342 = pneg %p122
        $region58: #{tpu_custom_call.1} parent=55 // pred_check_branch
          %344 = sbr.rel (%p342) target = $region60
        $region59: #{tpu_custom_call.1} parent=55 // pred_region
          %s345 = sand.u32 %s107, 1
          %s346 = scalar_lea.sflag [#allocation4], %s345
          %s347 = sand.u32 %s107, 1
          %s348 = smul.addr %s347, 8
          %s349 = scalar_lea.vmem [#allocation7], %s348
          %351 = dma.done %s346, 128
        $region60: #{tpu_custom_call.1} parent=55 // pred_fallthru
          _
      $region56: #{tpu_custom_call.1} parent=5 // pred_fallthru
        _
    $region6: #{tpu_custom_call.1} parent=1 // loop_footer
      %s21 = sadd.s32 1, %s17
    $region7: #{tpu_custom_call.1} parent=1 // loop_footer_branch
      %16 = sbr.rel target = $region3
    $region8: #{tpu_custom_call.1} parent=1 // loop_exit
      _
    %352 = vsyncpa [#allocation3], 1
    %s353 = scalar_lea.sflag [#allocation3], 1
    %354 = vsyncpa %s353, 1
    %355 = vsyncpa [#allocation6], 1
    %s356 = scalar_lea.sflag [#allocation6], 1
    %357 = vsyncpa %s356, 1
    %358 = vsyncpa [#allocation4], 1
    %s359 = scalar_lea.sflag [#allocation4], 1
    %360 = vsyncpa %s359, 1

</llo_original>
